<compile_context>
chip_gen: v5e
topology: v5e:2x2
jax: 0.10.0
libtpu: 0.0.40
codegen_flags: <defaults>
</compile_context>

<pallas_src>
import functools

import jax
import jax.numpy as jnp
from jax.experimental import pallas as pl
from jax.experimental.pallas import tpu as pltpu

_LANES = 128
_MAX_BLOCK_ROWS = 2048   # 2048 * 128 * 4 B = 1 MiB per f32 input block
_MAX_SPLITS = 2          # independent partial reductions (uses both TCs on v7x)


def _round_up(x, m):
    return ((x + m - 1) // m) * m


def _sublane_multiple(dtype):
    # f32 -> 8 rows, bf16/f16 -> 16, int8/fp8 -> 32 (sublane packing).
    return max(8, 32 // jnp.dtype(dtype).itemsize)


def _dice_partial_kernel(o_ref, t_ref, out_ref, acc_p, acc_o, acc_t, *,
                         rows, block_rows, steps, needs_mask):
    c = pl.program_id(0)   # parallel split index
    i = pl.program_id(1)   # reduction step within the split

    @pl.when(i == 0)
    def _():
        acc_p[...] = jnp.zeros_like(acc_p)
        acc_o[...] = jnp.zeros_like(acc_o)
        acc_t[...] = jnp.zeros_like(acc_t)

    o = o_ref[...].astype(jnp.float32)
    t = t_ref[...].astype(jnp.float32)

    if needs_mask:
        # Global (unclamped) block index; rows beyond `rows` (edge overhang or
        # phantom blocks of the parallel split) must not contribute.
        gblk = c * steps + i
        valid_rows = rows - gblk * block_rows          # may be <= 0
        row_ids = jax.lax.broadcasted_iota(jnp.int32, (block_rows, _LANES), 0)
        valid = row_ids < valid_rows
        o = jnp.where(valid, o, 0.0)
        t = jnp.where(valid, t, 0.0)

    folds = block_rows // 8

    def fold(x):  # (block_rows, 128) -> (8, 128) via pure VPU adds
        return jnp.sum(x.reshape(folds, 8, _LANES), axis=0)

    acc_p[...] += fold(o * t)
    acc_o[...] += fold(o)
    acc_t[...] += fold(t)

    @pl.when(i == pl.num_programs(1) - 1)
    def _():
        # Single final cross-lane/sublane reduce per quantity.
        out_ref[0, 0] = jnp.sum(acc_p[...])   # sum(output * target)
        out_ref[0, 1] = jnp.sum(acc_o[...])   # sum(output)
        out_ref[0, 2] = jnp.sum(acc_t[...])   # sum(target)


def dice_loss(output, target, smooth=0.0, eps=1e-7):
    assert output.shape == target.shape, "output/target must have matching shapes"
    total = output.size

    o_flat = output.reshape(-1)
    t_flat = target.reshape(-1)

    rem = total % _LANES
    if rem:
        # Only pad to the next 128-lane boundary (zeros are exact for all three
        # sums); the common case (total % 128 == 0) takes the zero-copy path.
        pad = _LANES - rem
        o_flat = jnp.pad(o_flat, (0, pad))
        t_flat = jnp.pad(t_flat, (0, pad))

    rows = o_flat.size // _LANES
    o2d = o_flat.reshape(rows, _LANES)
    t2d = t_flat.reshape(rows, _LANES)

    mult = max(_sublane_multiple(o2d.dtype), _sublane_multiple(t2d.dtype))
    block_rows = min(_MAX_BLOCK_ROWS, _round_up(rows, mult))
    num_blocks = pl.cdiv(rows, block_rows)
    n_split = min(_MAX_SPLITS, num_blocks)
    steps = pl.cdiv(num_blocks, n_split)
    needs_mask = (rows % block_rows != 0) or (num_blocks % n_split != 0)

    def in_map(c, i):
        # Clamp so every DMA targets a real block; overhanging / phantom rows
        # are zero-masked inside the kernel.
        return (jnp.minimum(c * steps + i, num_blocks - 1), 0)

    kernel = functools.partial(
        _dice_partial_kernel,
        rows=rows, block_rows=block_rows, steps=steps, needs_mask=needs_mask)

    partials = pl.pallas_call(
        kernel,
        out_shape=jax.ShapeDtypeStruct((n_split, 3), jnp.float32),
        grid_spec=pltpu.PrefetchScalarGridSpec(
            num_scalar_prefetch=0,
            grid=(n_split, steps),
            in_specs=[
                pl.BlockSpec((block_rows, _LANES), in_map),
                pl.BlockSpec((block_rows, _LANES), in_map),
            ],
            out_specs=pl.BlockSpec((1, 3), lambda c, i: (c, 0),
                                   memory_space=pltpu.SMEM),
            scratch_shapes=[pltpu.VMEM((8, _LANES), jnp.float32)] * 3,
        ),
        compiler_params=pltpu.CompilerParams(
            dimension_semantics=("parallel", "arbitrary")),
    )(o2d, t2d)

    sums = jnp.sum(partials, axis=0)  # combine per-split partials (tiny)
    return 1.0 - (2.0 * sums[0] + smooth) / (sums[1] + sums[2] + smooth + eps)


def _dice_loss_ref(output, target, smooth=0.0, eps=1e-7):
    o = output.astype(jnp.float32)
    t = target.astype(jnp.float32)
    return 1.0 - (2.0 * jnp.sum(o * t) + smooth) / (jnp.sum(o) + jnp.sum(t) + smooth + eps)


if __name__ == "__main__":
    key = jax.random.PRNGKey(0)
    k_out, k_tgt = jax.random.split(key)

    # Typical segmentation shapes: NCHW with batch=2, channels=4, spatial=16.
    shape = (2, 4, 16, 16)
    output = jax.nn.sigmoid(jax.random.normal(k_out, shape, dtype=jnp.float32))
    target = (jax.random.uniform(k_tgt, shape) > 0.5).astype(jnp.float32)

    loss = dice_loss(output, target, smooth=0.0, eps=1e-7)
    loss = jax.block_until_ready(loss)

    ref = _dice_loss_ref(output, target, smooth=0.0, eps=1e-7)
    assert jnp.allclose(loss, ref, rtol=1e-5, atol=1e-6), (loss, ref)

    print("KERNEL_OK")
</pallas_src>

<mosaic_0001>
module attributes {stable_mosaic.version = 11 : i64} {
  func.func @_dice_partial_kernel(%arg0: i32, %arg1: i32, %arg2: memref<16x128xf32, #tpu.memory_space<vmem>>, %arg3: memref<16x128xf32, #tpu.memory_space<vmem>>, %arg4: memref<1x3xf32, #tpu.memory_space<smem>>, %arg5: memref<8x128xf32, #tpu.memory_space<vmem>>, %arg6: memref<8x128xf32, #tpu.memory_space<vmem>>, %arg7: memref<8x128xf32, #tpu.memory_space<vmem>>) attributes {dimension_semantics = [#tpu.dimension_semantics<parallel>, #tpu.dimension_semantics<arbitrary>], iteration_bounds = array<i64: 1, 1>, scalar_prefetch = 0 : i64, scratch_operands = 3 : i64, tpu.core_type = #tpu.core_type<tc>, window_params = [{transform_indices = @transform_0, window_bounds = array<i64: 16, 128>}, {transform_indices = @transform_1, window_bounds = array<i64: 16, 128>}, {transform_indices = @transform_2, window_bounds = array<i64: 1, 3>}]} {
    %c0_i32 = arith.constant 0 : i32
    %0 = arith.cmpi eq, %arg1, %c0_i32 : i32
    %1 = arith.extui %0 : i1 to i32
    %c0_i32_0 = arith.constant 0 : i32
    %2 = arith.cmpi ne, %1, %c0_i32_0 : i32
    scf.if %2 {
      %cst_20 = arith.constant 0.000000e+00 : f32
      %24 = vector.broadcast %cst_20 : f32 to vector<8x128xf32>
      %c0_21 = arith.constant 0 : index
      %c0_22 = arith.constant 0 : index
      %25 = vector.load %arg5[%c0_21, %c0_22] : memref<8x128xf32, #tpu.memory_space<vmem>>, vector<8x128xf32>
      tpu.vector_store %arg5[%c0_21, %c0_22], %24 {strides = array<i32>} : memref<8x128xf32, #tpu.memory_space<vmem>>, vector<8x128xf32>,
      %cst_23 = arith.constant 0.000000e+00 : f32
      %26 = vector.broadcast %cst_23 : f32 to vector<8x128xf32>
      %c0_24 = arith.constant 0 : index
      %c0_25 = arith.constant 0 : index
      %27 = vector.load %arg6[%c0_24, %c0_25] : memref<8x128xf32, #tpu.memory_space<vmem>>, vector<8x128xf32>
      tpu.vector_store %arg6[%c0_24, %c0_25], %26 {strides = array<i32>} : memref<8x128xf32, #tpu.memory_space<vmem>>, vector<8x128xf32>,
      %cst_26 = arith.constant 0.000000e+00 : f32
      %28 = vector.broadcast %cst_26 : f32 to vector<8x128xf32>
      %c0_27 = arith.constant 0 : index
      %c0_28 = arith.constant 0 : index
      %29 = vector.load %arg7[%c0_27, %c0_28] : memref<8x128xf32, #tpu.memory_space<vmem>>, vector<8x128xf32>
      tpu.vector_store %arg7[%c0_27, %c0_28], %28 {strides = array<i32>} : memref<8x128xf32, #tpu.memory_space<vmem>>, vector<8x128xf32>,
    } else {
    }
    %c0 = arith.constant 0 : index
    %c0_1 = arith.constant 0 : index
    %3 = vector.load %arg2[%c0, %c0_1] : memref<16x128xf32, #tpu.memory_space<vmem>>, vector<16x128xf32>
    %c0_2 = arith.constant 0 : index
    %c0_3 = arith.constant 0 : index
    %4 = vector.load %arg3[%c0_2, %c0_3] : memref<16x128xf32, #tpu.memory_space<vmem>>, vector<16x128xf32>
    %c0_4 = arith.constant 0 : index
    %c0_5 = arith.constant 0 : index
    %5 = vector.load %arg5[%c0_4, %c0_5] : memref<8x128xf32, #tpu.memory_space<vmem>>, vector<8x128xf32>
    %6 = arith.mulf %3, %4 : vector<16x128xf32>
    %7 = vector.shape_cast %6 : vector<16x128xf32> to vector<2x8x128xf32>
    %cst = arith.constant dense<0.000000e+00> : vector<8x128xf32>
    %8 = vector.multi_reduction <add>, %7, %cst [0] : vector<2x8x128xf32> to vector<8x128xf32>
    %9 = arith.addf %5, %8 : vector<8x128xf32>
    %c0_6 = arith.constant 0 : index
    %c0_7 = arith.constant 0 : index
    %10 = vector.load %arg5[%c0_6, %c0_7] : memref<8x128xf32, #tpu.memory_space<vmem>>, vector<8x128xf32>
    tpu.vector_store %arg5[%c0_6, %c0_7], %9 {strides = array<i32>} : memref<8x128xf32, #tpu.memory_space<vmem>>, vector<8x128xf32>,
    %c0_8 = arith.constant 0 : index
    %c0_9 = arith.constant 0 : index
    %11 = vector.load %arg6[%c0_8, %c0_9] : memref<8x128xf32, #tpu.memory_space<vmem>>, vector<8x128xf32>
    %12 = vector.shape_cast %3 : vector<16x128xf32> to vector<2x8x128xf32>
    %cst_10 = arith.constant dense<0.000000e+00> : vector<8x128xf32>
    %13 = vector.multi_reduction <add>, %12, %cst_10 [0] : vector<2x8x128xf32> to vector<8x128xf32>
    %14 = arith.addf %11, %13 : vector<8x128xf32>
    %c0_11 = arith.constant 0 : index
    %c0_12 = arith.constant 0 : index
    %15 = vector.load %arg6[%c0_11, %c0_12] : memref<8x128xf32, #tpu.memory_space<vmem>>, vector<8x128xf32>
    tpu.vector_store %arg6[%c0_11, %c0_12], %14 {strides = array<i32>} : memref<8x128xf32, #tpu.memory_space<vmem>>, vector<8x128xf32>,
    %c0_13 = arith.constant 0 : index
    %c0_14 = arith.constant 0 : index
    %16 = vector.load %arg7[%c0_13, %c0_14] : memref<8x128xf32, #tpu.memory_space<vmem>>, vector<8x128xf32>
    %17 = vector.shape_cast %4 : vector<16x128xf32> to vector<2x8x128xf32>
    %cst_15 = arith.constant dense<0.000000e+00> : vector<8x128xf32>
    %18 = vector.multi_reduction <add>, %17, %cst_15 [0] : vector<2x8x128xf32> to vector<8x128xf32>
    %19 = arith.addf %16, %18 : vector<8x128xf32>
    %c0_16 = arith.constant 0 : index
    %c0_17 = arith.constant 0 : index
    %20 = vector.load %arg7[%c0_16, %c0_17] : memref<8x128xf32, #tpu.memory_space<vmem>>, vector<8x128xf32>
    tpu.vector_store %arg7[%c0_16, %c0_17], %19 {strides = array<i32>} : memref<8x128xf32, #tpu.memory_space<vmem>>, vector<8x128xf32>,
    %c0_i32_18 = arith.constant 0 : i32
    %21 = arith.cmpi eq, %arg1, %c0_i32_18 : i32
    %22 = arith.extui %21 : i1 to i32
    %c0_i32_19 = arith.constant 0 : i32
    %23 = arith.cmpi ne, %22, %c0_i32_19 : i32
    scf.if %23 {
      %c0_20 = arith.constant 0 : index
      %c0_21 = arith.constant 0 : index
      %24 = vector.load %arg5[%c0_20, %c0_21] : memref<8x128xf32, #tpu.memory_space<vmem>>, vector<8x128xf32>
      %25 = vector.shape_cast %24 : vector<8x128xf32> to vector<1x8x128xf32>
      %cst_22 = arith.constant dense<0.000000e+00> : vector<1xf32>
      %26 = vector.multi_reduction <add>, %25, %cst_22 [1, 2] : vector<1x8x128xf32> to vector<1xf32>
      %27 = vector.shape_cast %26 : vector<1xf32> to vector<1x1x1xf32>
      %28 = vector.extract %27[0, 0, 0] : f32 from vector<1x1x1xf32>
      %c0_23 = arith.constant 0 : index
      %c0_24 = arith.constant 0 : index
      %29 = memref.load %arg4[%c0_23, %c0_24] : memref<1x3xf32, #tpu.memory_space<smem>>
      memref.store %28, %arg4[%c0_23, %c0_24] : memref<1x3xf32, #tpu.memory_space<smem>>
      %c0_25 = arith.constant 0 : index
      %c0_26 = arith.constant 0 : index
      %30 = vector.load %arg6[%c0_25, %c0_26] : memref<8x128xf32, #tpu.memory_space<vmem>>, vector<8x128xf32>
      %31 = vector.shape_cast %30 : vector<8x128xf32> to vector<1x8x128xf32>
      %cst_27 = arith.constant dense<0.000000e+00> : vector<1xf32>
      %32 = vector.multi_reduction <add>, %31, %cst_27 [1, 2] : vector<1x8x128xf32> to vector<1xf32>
      %33 = vector.shape_cast %32 : vector<1xf32> to vector<1x1x1xf32>
      %34 = vector.extract %33[0, 0, 0] : f32 from vector<1x1x1xf32>
      %c0_28 = arith.constant 0 : index
      %c1 = arith.constant 1 : index
      %35 = memref.load %arg4[%c0_28, %c1] : memref<1x3xf32, #tpu.memory_space<smem>>
      memref.store %34, %arg4[%c0_28, %c1] : memref<1x3xf32, #tpu.memory_space<smem>>
      %c0_29 = arith.constant 0 : index
      %c0_30 = arith.constant 0 : index
      %36 = vector.load %arg7[%c0_29, %c0_30] : memref<8x128xf32, #tpu.memory_space<vmem>>, vector<8x128xf32>
      %37 = vector.shape_cast %36 : vector<8x128xf32> to vector<1x8x128xf32>
      %cst_31 = arith.constant dense<0.000000e+00> : vector<1xf32>
      %38 = vector.multi_reduction <add>, %37, %cst_31 [1, 2] : vector<1x8x128xf32> to vector<1xf32>
      %39 = vector.shape_cast %38 : vector<1xf32> to vector<1x1x1xf32>
      %40 = vector.extract %39[0, 0, 0] : f32 from vector<1x1x1xf32>
      %c0_32 = arith.constant 0 : index
      %c2 = arith.constant 2 : index
      %41 = memref.load %arg4[%c0_32, %c2] : memref<1x3xf32, #tpu.memory_space<smem>>
      memref.store %40, %arg4[%c0_32, %c2] : memref<1x3xf32, #tpu.memory_space<smem>>
    } else {
    }
    return
  }
  func.func @transform_0(%arg0: i32, %arg1: i32) -> (i32, i32) {
    %c1_i32 = arith.constant 1 : i32
    %0 = arith.muli %arg0, %c1_i32 : i32
    %1 = arith.addi %0, %arg1 : i32
    %c0_i32 = arith.constant 0 : i32
    %2 = arith.minsi %1, %c0_i32 : i32
    %c0_i32_0 = arith.constant 0 : i32
    %c0_i32_1 = arith.constant 0 : i32
    return %2, %c0_i32_0 : i32, i32
  }
  func.func @transform_1(%arg0: i32, %arg1: i32) -> (i32, i32) {
    %c1_i32 = arith.constant 1 : i32
    %0 = arith.muli %arg0, %c1_i32 : i32
    %1 = arith.addi %0, %arg1 : i32
    %c0_i32 = arith.constant 0 : i32
    %2 = arith.minsi %1, %c0_i32 : i32
    %c0_i32_0 = arith.constant 0 : i32
    %c0_i32_1 = arith.constant 0 : i32
    return %2, %c0_i32_0 : i32, i32
  }
  func.func @transform_2(%arg0: i32, %arg1: i32) -> (i32, i32) {
    %c0_i32 = arith.constant 0 : i32
    %c0_i32_0 = arith.constant 0 : i32
    return %arg0, %c0_i32 : i32, i32
  }
}

</mosaic_0001>

<llo_original>
// kernel: tpu_custom_call.1
$region0: #{tpu_custom_call.1}
  #allocation0 [shape = 'u32[]', space=smem, size = 0x4, offset = 0x4, fixed_abs, tag = 'smem constant byte address 0x4 - core index']
  #allocation1 [shape = 'u32[72,128]{1,0:T(1,128)}', space=vmem, size = 0x9000, scoped, tag = 'internal scratch']
  #allocation2 [shape = 'f32[8,128]{1,0:T(8,128)}', space=vmem, size = 0x1000, scoped, tag = 'scratch operand']
  #allocation3 [shape = 'f32[8,128]{1,0:T(8,128)}', space=vmem, size = 0x1000, scoped, tag = 'scratch operand']
  #allocation4 [shape = 'f32[8,128]{1,0:T(8,128)}', space=vmem, size = 0x1000, scoped, tag = 'scratch operand']
  %s0 = inlined_call_operand.hbm [shape: f32[16,128], index: 0, kind: input, shape index: {}]
  %s1 = inlined_call_operand.hbm [shape: f32[16,128], index: 1, kind: input, shape index: {}]
  %s2 = inlined_call_operand.hbm [shape: f32[1,3], index: 2, kind: output, shape index: {}]
  %s3 = sld [smem:[#allocation0]]
  $region34: #{tpu_custom_call.1} parent=0
    _
  %s5 = ssub.s32 1, %s3
  %s6 = scalar_select 0, %s5, %s3
  $region1: #{tpu_custom_call.1} parent=0
    #allocation5 [shape = 'u8[8192]{0}', space=vmem, size = 0x2000, scoped, tag = 'input window, operand 0, single buffered']
    #allocation6 [shape = 's32[1]{0}', space=sflag, size = 0x4, scoped, tag = 'scoped memory for tpu_custom_call.1']
    #allocation7 [shape = 's32[1]{0}', space=sflag, size = 0x4, scoped, tag = 'scoped memory for tpu_custom_call.1']
    #allocation8 [shape = 'u8[8192]{0}', space=vmem, size = 0x2000, scoped, tag = 'input window, operand 1, single buffered']
    #allocation9 [shape = 's32[1]{0}', space=sflag, size = 0x4, scoped, tag = 'scoped memory for tpu_custom_call.1']
    #allocation10 [shape = 'u8[512]{0}', space=smem, size = 0x200, scoped, tag = 'output window, operand 0, single buffered']
    %7 = vsyncpa [#allocation6], 0
    %8 = vsyncpa [#allocation9], 0
    %9 = vsyncpa [#allocation7], 0
    // Predicated region
    $region2: #{tpu_custom_call.1} parent=1 // pred_check
      _
    $region3: #{tpu_custom_call.1} parent=1 // pred_check_branch
      %11 = sbr.rel (0) target = $region5
    $region4: #{tpu_custom_call.1} parent=1 // pred_region
      %s12 = sadd.s32 0, 0
      %p13 = scmp.lt.s32.totalorder %s12, 0
      %s14 = scalar_select %p13, %s12, 0
      %s15 = smul.u32 2, %s14
      %17 = vsyncadd [#allocation6], 0
      %s18 = smul.addr %s15, 8
      %s19 = scalar_lea.hbm %s0, %s18
      %s20 = sshll.u32 %s19, 4
      %s21 = int_to_ptr.hbm [resolvable:$true] %s20
      %s22 = sshll.u32 [#allocation5], 4
      %s23 = int_to_ptr.vmem [resolvable:$true] %s22
      %28 = dma.hbm_to_vmem [thread:$0]  %s21, 256, %s23, [#allocation6], 128, 128, 8
    $region5: #{tpu_custom_call.1} parent=1 // pred_fallthru
      _
    // Predicated region
    $region6: #{tpu_custom_call.1} parent=1 // pred_check
      _
    $region7: #{tpu_custom_call.1} parent=1 // pred_check_branch
      %30 = sbr.rel (0) target = $region9
    $region8: #{tpu_custom_call.1} parent=1 // pred_region
      %s31 = sadd.s32 0, 0
      %p32 = scmp.lt.s32.totalorder %s31, 0
      %s33 = scalar_select %p32, %s31, 0
      %s34 = smul.u32 2, %s33
      %36 = vsyncadd [#allocation9], 0
      %s37 = smul.addr %s34, 8
      %s38 = scalar_lea.hbm %s1, %s37
      %s39 = sshll.u32 %s38, 4
      %s40 = int_to_ptr.hbm [resolvable:$true] %s39
      %s41 = sshll.u32 [#allocation8], 4
      %s42 = int_to_ptr.vmem [resolvable:$true] %s41
      %47 = dma.hbm_to_vmem [thread:$0]  %s40, 256, %s42, [#allocation9], 128, 128, 8
    $region9: #{tpu_custom_call.1} parent=1 // pred_fallthru
      _
    // Predicated region
    $region10: #{tpu_custom_call.1} parent=1 // pred_check
      _
    $region11: #{tpu_custom_call.1} parent=1 // pred_check_branch
      %49 = sbr.rel (0) target = $region13
    $region12: #{tpu_custom_call.1} parent=1 // pred_region
      %51 = dma.done [#allocation6], 256
    $region13: #{tpu_custom_call.1} parent=1 // pred_fallthru
      _
    // Predicated region
    $region14: #{tpu_custom_call.1} parent=1 // pred_check
      _
    $region15: #{tpu_custom_call.1} parent=1 // pred_check_branch
      %53 = sbr.rel (0) target = $region17
    $region16: #{tpu_custom_call.1} parent=1 // pred_region
      %55 = dma.done [#allocation9], 256
    $region17: #{tpu_custom_call.1} parent=1 // pred_fallthru
      _
    %s56 = sadd.s32 0, 0
    %p57 = scmp.lt.s32.totalorder %s56, 0
    %s58 = scalar_select %p57, %s56, 0
    %s59 = smul.u32 2, %s58
    %s60 = sadd.s32 0, 0
    %p61 = scmp.lt.s32.totalorder %s60, 0
    %s62 = scalar_select %p61, %s60, 0
    %s63 = smul.u32 2, %s62
    %p64 = scmp.eq.s32.totalorder 0, 0
    // Predicated region
    $region18: #{tpu_custom_call.1} parent=1 // pred_check
      %p65 = pneg %p64
    $region19: #{tpu_custom_call.1} parent=1 // pred_check_branch
      %67 = sbr.rel (%p65) target = $region21
    $region20: #{tpu_custom_call.1} parent=1 // pred_region
      %68 = vst [vmem:[#allocation2] sm:$0xff] 0.0
      %69 = vst [vmem:[#allocation3] sm:$0xff] 0.0
      %70 = vst [vmem:[#allocation4] sm:$0xff] 0.0
    $region21: #{tpu_custom_call.1} parent=1 // pred_fallthru
      _
    %v71 = vld [vmem:[#allocation5] sm:$0xff]
    %v72 = vld [vmem:[#allocation5 + $0x8] sm:$0xff]
    %v73 = vld [vmem:[#allocation8] sm:$0xff]
    %v74 = vld [vmem:[#allocation8 + $0x8] sm:$0xff]
    %v75 = vld [vmem:[#allocation2] sm:$0xff]
    %v76 = vmul.f32 %v71, %v73
    %v77 = vmul.f32 %v72, %v74
    %v78 = vadd.f32 %v76, %v77
    %v79 = vadd.f32 %v75, %v78
    %80 = vst [vmem:[#allocation2] sm:$0xff] %v79
    %v81 = vld [vmem:[#allocation3] sm:$0xff]
    %v82 = vadd.f32 %v71, %v72
    %v83 = vadd.f32 %v81, %v82
    %84 = vst [vmem:[#allocation3] sm:$0xff] %v83
    %v85 = vld [vmem:[#allocation4] sm:$0xff]
    %v86 = vadd.f32 %v73, %v74
    %v87 = vadd.f32 %v85, %v86
    %88 = vst [vmem:[#allocation4] sm:$0xff] %v87
    // Predicated region
    $region22: #{tpu_custom_call.1} parent=1 // pred_check
      %p89 = pneg %p64
    $region23: #{tpu_custom_call.1} parent=1 // pred_check_branch
      %91 = sbr.rel (%p89) target = $region25
    $region24: #{tpu_custom_call.1} parent=1 // pred_region
      %v92 = vld [vmem:[#allocation2] sm:$0xff]
      %93 = vadd.xlane.f32.xlu0 %v92
      %v94 = vpop.xlane.xlu0 %93
      %v95 = vrot.slane %v94, 4
      %v96 = vadd.f32 %v94, %v95
      %v97 = vrot.slane %v96, 2
      %v98 = vadd.f32 %v96, %v97
      %v99 = vrot.slane %v98, 1
      %v100 = vadd.f32 %v98, %v99
      %s101 = vtos %v100
      %s102 = scalar_lea.smem [#allocation10], 0
      %103 = sst [smem:[%s102]] %s101
      %v104 = vld [vmem:[#allocation3] sm:$0xff]
      %105 = vadd.xlane.f32.xlu0 %v104
      %v106 = vpop.xlane.xlu0 %105
      %v107 = vrot.slane %v106, 4
      %v108 = vadd.f32 %v106, %v107
      %v109 = vrot.slane %v108, 2
      %v110 = vadd.f32 %v108, %v109
      %v111 = vrot.slane %v110, 1
      %v112 = vadd.f32 %v110, %v111
      %s113 = vtos %v112
      %s114 = scalar_lea.smem [#allocation10], 1
      %115 = sst [smem:[%s114]] %s113
      %v116 = vld [vmem:[#allocation4] sm:$0xff]
      %117 = vadd.xlane.f32.xlu0 %v116
      %v118 = vpop.xlane.xlu0 %117
      %v119 = vrot.slane %v118, 4
      %v120 = vadd.f32 %v118, %v119
      %v121 = vrot.slane %v120, 2
      %v122 = vadd.f32 %v120, %v121
      %v123 = vrot.slane %v122, 1
      %v124 = vadd.f32 %v122, %v123
      %s125 = vtos %v124
      %s126 = scalar_lea.smem [#allocation10], 2
      %127 = sst [smem:[%s126]] %s125
    $region25: #{tpu_custom_call.1} parent=1 // pred_fallthru
      _
    // Predicated region
    $region26: #{tpu_custom_call.1} parent=1 // pred_check
      _
    $region27: #{tpu_custom_call.1} parent=1 // pred_check_branch
      %129 = sbr.rel (0) target = $region29
    $region28: #{tpu_custom_call.1} parent=1 // pred_region
      %131 = vsyncadd [#allocation7], 0
      %s133 = sshll.u32 %s2, 4
      %s134 = int_to_ptr.hbm [resolvable:$true] %s133
      %136 = dma.smem_to_hbm [#allocation10], 16, %s134, [#allocation7]
    $region29: #{tpu_custom_call.1} parent=1 // pred_fallthru
      _
    // Predicated region
    $region30: #{tpu_custom_call.1} parent=1 // pred_check
      _
    $region31: #{tpu_custom_call.1} parent=1 // pred_check_branch
      %138 = sbr.rel (0) target = $region33
    $region32: #{tpu_custom_call.1} parent=1 // pred_region
      %140 = dma.done [#allocation7], 16
    $region33: #{tpu_custom_call.1} parent=1 // pred_fallthru
      _
    %141 = sfence
    %142 = vsyncpa [#allocation6], 1
    %143 = vsyncpa [#allocation9], 1
    %144 = vsyncpa [#allocation7], 1

</llo_original>
